<compile_context>
chip_gen: v7x
topology: tpu7x:2x2x1
jax: 0.10.0
libtpu: 0.0.40
codegen_flags: <defaults>
</compile_context>

<pallas_src>
import functools

import jax
import jax.numpy as jnp
from jax import lax
from jax.experimental import pallas as pl
from jax.experimental.pallas import tpu as pltpu


# ---------------------------------------------------------------------------
# Pallas kernel: whole forward pass (resize included), whole batch, one step.
# ---------------------------------------------------------------------------
def attn_kernel(q_ref, f_ref, sel_ref, wkv_ref, kvshift_ref, qaff_ref, out_ref,
                *, n_valid):
    B, Np, C = q_ref.shape
    S_pad = sel_ref.shape[-1]

    # In-kernel nearest resize: static 0/1 column selection (exact) applied to the
    # raw flattened feature map, per batch, lane-concatenated -> (C, B*S_pad) bf16.
    f_r = jnp.concatenate(
        [jnp.dot(f_ref[b], sel_ref[...],
                 preferred_element_type=jnp.float32).astype(jnp.bfloat16)
         for b in range(B)],
        axis=-1)

    # Fused f_key / f_value 1x1 projections (BN scale pre-folded into wkv):
    # one (2C, C) @ (C, B*S_pad) MXU matmul with f32 accumulation.
    kv = jnp.dot(wkv_ref[...], f_r, preferred_element_type=jnp.float32)
    kv = kv + kvshift_ref[...]                     # BN shift (key) / bias (value)
    key_t = jnp.maximum(kv[:C], 0.0)               # (C, B*S_pad)  ReLU on key half
    value_t = kv[C:]                               # (C, B*S_pad)

    # -inf mask for the padded resize columns (S_pad > n_valid); hoisted out of loop.
    lane = lax.broadcasted_iota(jnp.int32, (1, S_pad), 1)
    mask = jnp.where(lane < n_valid, 0.0, -1e30).astype(jnp.float32)

    for b in range(B):                             # static unroll, B=2
        # f_query: grouped Conv1d(k=1)+ReLU == per-row scale/bias + ReLU,
        # with dim**-0.5 pre-folded (exact: ReLU is positively homogeneous).
        q = jnp.maximum(q_ref[b] * qaff_ref[:, 0:1] + qaff_ref[:, 1:2], 0.0)  # (Np, C)
        k_b = key_t[:, b * S_pad:(b + 1) * S_pad]
        v_b = value_t[:, b * S_pad:(b + 1) * S_pad]

        # sim_map = dim^-0.5 * (query @ key) ; softmax over spatial positions.
        sim = jnp.dot(q, k_b, preferred_element_type=jnp.float32) + mask      # (Np, S_pad)
        sim = sim - jnp.max(sim, axis=-1, keepdims=True)
        e = jnp.exp(sim)
        p = e * pl.reciprocal(jnp.sum(e, axis=-1, keepdims=True), approx=True)

        # context = sim_map @ value ; value stored transposed, contract last dims.
        ctx = lax.dot_general(p, v_b, (((1,), (1,)), ((), ())),
                              preferred_element_type=jnp.float32)             # (Np, C)

        # W: grouped Conv1d(k=1) (zero-initialised in the module): per-row scale/bias.
        out_ref[b] = (ctx * qaff_ref[:, 2:3] + qaff_ref[:, 3:4]).astype(out_ref.dtype)


# ---------------------------------------------------------------------------
# Wrapper: only a free reshape + bf16 cast; everything else is in the kernel.
# ---------------------------------------------------------------------------
def anchor_vec_attention(query, feat, packed, out_size=(10, 25)):
    B, Np, C = query.shape
    _, _, H, W = feat.shape
    HW = H * W
    S_pad = packed["sel"].shape[-1]
    n_valid = out_size[0] * out_size[1]

    feat_flat = feat.reshape(B, C, HW).astype(jnp.bfloat16)   # (B, C, H*W)

    kernel = functools.partial(attn_kernel, n_valid=n_valid)

    flops = (2 * B * C * HW * S_pad            # in-kernel resize selection
             + 2 * (2 * C) * C * B * S_pad     # fused key/value projection
             + 2 * 2 * B * Np * C * S_pad)     # sim + ctx matmuls
    bytes_accessed = (query.size * 4 + feat_flat.size * 2 + packed["sel"].size * 2
                      + packed["wkv"].size * 2 + packed["kv_shift"].size * 4
                      + packed["q_aff"].size * 4 + B * Np * C * 4)
    cost = pl.CostEstimate(flops=flops, transcendentals=B * Np * S_pad,
                           bytes_accessed=bytes_accessed)

    vmem_spec = pl.BlockSpec(memory_space=pltpu.MemorySpace.VMEM)
    return pl.pallas_call(
        kernel,
        out_shape=jax.ShapeDtypeStruct((B, Np, C), jnp.float32),
        in_specs=[vmem_spec] * 6,
        out_specs=vmem_spec,
        cost_estimate=cost,
    )(query, feat_flat, packed["sel"], packed["wkv"], packed["kv_shift"],
      packed["q_aff"])


# ---------------------------------------------------------------------------
# Static nearest-neighbour selection matrix (matches F.interpolate 'nearest').
# ---------------------------------------------------------------------------
def build_resize_selection(in_hw, out_size, dtype=jnp.bfloat16):
    H, W = in_hw
    Ho, Wo = out_size
    S = Ho * Wo
    S_pad = max(128, -(-S // 128) * 128)
    src_h = jnp.floor(jnp.arange(Ho) * (H / Ho)).astype(jnp.int32)
    src_w = jnp.floor(jnp.arange(Wo) * (W / Wo)).astype(jnp.int32)
    src = (src_h[:, None] * W + src_w[None, :]).reshape(-1)        # (S,) flat source idx
    sel = jnp.zeros((H * W, S_pad), dtype)
    sel = sel.at[src, jnp.arange(S)].set(1)                        # pad columns stay 0
    return sel


# ---------------------------------------------------------------------------
# Deterministic "raw" parameters (shapes follow the module's __init__).
# ---------------------------------------------------------------------------
def init_params(key, n_query, dim):
    ks = jax.random.split(key, 9)
    eps = 1e-5
    # f_query: Conv1d(Np, Np, 1, groups=Np) -> per-row scale (Np,1) + bias (Np,1)
    wq_scale = 1.0 + 0.5 * jax.random.normal(ks[0], (n_query, 1), jnp.float32)
    wq_bias = 0.1 * jax.random.normal(ks[1], (n_query, 1), jnp.float32)
    # f_key: Conv2d(dim, dim, 1, bias=False) + BatchNorm (inference-mode, folded)
    wk = jax.random.normal(ks[2], (dim, dim), jnp.float32) / jnp.sqrt(dim)   # (Cout, Cin)
    gamma = 1.0 + 0.1 * jax.random.normal(ks[3], (dim,), jnp.float32)
    beta = 0.1 * jax.random.normal(ks[4], (dim,), jnp.float32)
    run_mean = 0.1 * jax.random.normal(ks[5], (dim,), jnp.float32)
    run_var = jnp.abs(jax.random.normal(ks[6], (dim,), jnp.float32)) + 0.5
    bn_scale = gamma / jnp.sqrt(run_var + eps)
    bn_shift = beta - run_mean * bn_scale
    # f_value: Conv2d(dim, dim, 1) with bias
    wv = jax.random.normal(ks[7], (dim, dim), jnp.float32) / jnp.sqrt(dim)   # (Cout, Cin)
    v_bias = 0.1 * jax.random.normal(ks[8], (dim,), jnp.float32)
    # W: Conv1d(Np, Np, 1, groups=Np) with weight & bias constant-initialised to 0
    w_scale = jnp.zeros((n_query, 1), jnp.float32)
    w_bias = jnp.zeros((n_query, 1), jnp.float32)
    return dict(wq_scale=wq_scale, wq_bias=wq_bias, wk=wk, bn_scale=bn_scale,
                bn_shift=bn_shift, wv=wv, v_bias=v_bias,
                w_scale=w_scale, w_bias=w_bias)


# ---------------------------------------------------------------------------
# Pack raw parameters into the tensors the kernel consumes.
# ---------------------------------------------------------------------------
def pack_params(p, dim, in_hw=(16, 16), out_size=(10, 25)):
    scale = jnp.float32(dim) ** -0.5
    # Fold BN scale into the key weights (exact: applied before the ReLU).
    wk_folded = p["wk"] * p["bn_scale"][:, None]
    wkv = jnp.concatenate([wk_folded, p["wv"]], axis=0).astype(jnp.bfloat16)    # (2C, C)
    kv_shift = jnp.concatenate([p["bn_shift"], p["v_bias"]]).reshape(2 * dim, 1)  # (2C, 1) f32
    # dim**-0.5 folded into the f_query affine (exact: ReLU positively homogeneous).
    q_aff = jnp.concatenate([p["wq_scale"] * scale, p["wq_bias"] * scale,
                             p["w_scale"], p["w_bias"]], axis=1)                # (Np, 4) f32
    sel = build_resize_selection(in_hw, out_size)                               # (H*W, S_pad) bf16
    return dict(wkv=wkv, kv_shift=kv_shift, q_aff=q_aff, sel=sel)


# ---------------------------------------------------------------------------
# Pure-JAX f32 reference of the module's forward pass (for correctness check).
# ---------------------------------------------------------------------------
def nearest_resize_flatten(feat, size=(10, 25)):
    B, C, H, W = feat.shape
    Ho, Wo = size
    src_h = jnp.floor(jnp.arange(Ho) * (H / Ho)).astype(jnp.int32)
    src_w = jnp.floor(jnp.arange(Wo) * (W / Wo)).astype(jnp.int32)
    x = feat[:, :, src_h, :][:, :, :, src_w]          # (B, C, Ho, Wo)
    return x.reshape(B, C, Ho * Wo)                   # (B, C, S)


def reference(query, feat, p, dim):
    fr = jnp.transpose(nearest_resize_flatten(feat), (0, 2, 1))             # (B, S, C)
    q = jnp.maximum(query * p["wq_scale"] + p["wq_bias"], 0.0)
    key = jnp.maximum((fr @ p["wk"].T) * p["bn_scale"] + p["bn_shift"], 0.0)
    value = fr @ p["wv"].T + p["v_bias"]
    sim = (q @ jnp.swapaxes(key, 1, 2)) * (dim ** -0.5)
    sim = jax.nn.softmax(sim, axis=-1)
    ctx = sim @ value
    return ctx * p["w_scale"] + p["w_bias"]


if __name__ == "__main__":
    B, Np, C, H, W = 2, 8, 32, 16, 16     # n_query=8, dim=32, S=250 after resize
    root = jax.random.PRNGKey(0)
    kq, kf, kp = jax.random.split(root, 3)
    query = jax.random.normal(kq, (B, Np, C), jnp.float32)
    feat = jax.random.normal(kf, (B, C, H, W), jnp.float32)
    raw = init_params(kp, Np, C)
    packed = pack_params(raw, C, in_hw=(H, W))

    # Faithful run (module's W is zero-initialised, so the output is zeros).
    out = anchor_vec_attention(query, feat, packed)
    jax.block_until_ready(out)
    ref = reference(query, feat, raw, C)
    assert out.shape == (B, Np, C)
    # Tolerance covers bf16 feat/weight rounding (~0.5%) + approx reciprocal (~1e-3).
    assert jnp.allclose(out, ref, atol=3e-2, rtol=3e-2)

    # Sanity-check the full attention path with a non-zero output projection.
    raw_nz = dict(raw)
    raw_nz["w_scale"] = jnp.linspace(0.5, 1.5, Np, dtype=jnp.float32).reshape(Np, 1)
    raw_nz["w_bias"] = jnp.linspace(-0.1, 0.1, Np, dtype=jnp.float32).reshape(Np, 1)
    packed_nz = pack_params(raw_nz, C, in_hw=(H, W))
    out_nz = anchor_vec_attention(query, feat, packed_nz)
    jax.block_until_ready(out_nz)
    ref_nz = reference(query, feat, raw_nz, C)
    assert jnp.allclose(out_nz, ref_nz, atol=3e-2, rtol=3e-2)

    print("KERNEL_OK")
</pallas_src>

<mosaic_0001>
module attributes {stable_mosaic.version = 11 : i64} {
  func.func @attn_kernel(%arg0: memref<2x8x32xf32, #tpu.memory_space<vmem>>, %arg1: memref<2x32x256xbf16, #tpu.memory_space<vmem>>, %arg2: memref<256x256xbf16, #tpu.memory_space<vmem>>, %arg3: memref<64x32xbf16, #tpu.memory_space<vmem>>, %arg4: memref<64x1xf32, #tpu.memory_space<vmem>>, %arg5: memref<8x4xf32, #tpu.memory_space<vmem>>, %arg6: memref<2x8x32xf32, #tpu.memory_space<vmem>>) attributes {dimension_semantics = [], scalar_prefetch = 0 : i64, scratch_operands = 0 : i64, tpu.core_type = #tpu.core_type<tc>} {
    %c0 = arith.constant 0 : index
    %c0_0 = arith.constant 0 : index
    %c0_1 = arith.constant 0 : index
    %0 = vector.load %arg1[%c0, %c0_0, %c0_1] : memref<2x32x256xbf16, #tpu.memory_space<vmem>>, vector<1x32x256xbf16>
    %1 = vector.shape_cast %0 : vector<1x32x256xbf16> to vector<32x256xbf16>
    %c0_2 = arith.constant 0 : index
    %c0_3 = arith.constant 0 : index
    %2 = vector.load %arg2[%c0_2, %c0_3] : memref<256x256xbf16, #tpu.memory_space<vmem>>, vector<256x256xbf16>
    %cst = arith.constant dense<0.000000e+00> : vector<32x256xf32>
    %3 = tpu.matmul %1, %2, %cst {dimension_numbers = #tpu.dot_dimension_numbers<[1], [0], [0], [1], [0, 0, 1, 1], [], []>} : vector<32x256xbf16>, vector<256x256xbf16>, vector<32x256xf32> -> vector<32x256xf32>
    %4 = arith.truncf %3 : vector<32x256xf32> to vector<32x256xbf16>
    %c1 = arith.constant 1 : index
    %c0_4 = arith.constant 0 : index
    %c0_5 = arith.constant 0 : index
    %5 = vector.load %arg1[%c1, %c0_4, %c0_5] : memref<2x32x256xbf16, #tpu.memory_space<vmem>>, vector<1x32x256xbf16>
    %6 = vector.shape_cast %5 : vector<1x32x256xbf16> to vector<32x256xbf16>
    %c0_6 = arith.constant 0 : index
    %c0_7 = arith.constant 0 : index
    %7 = vector.load %arg2[%c0_6, %c0_7] : memref<256x256xbf16, #tpu.memory_space<vmem>>, vector<256x256xbf16>
    %cst_8 = arith.constant dense<0.000000e+00> : vector<32x256xf32>
    %8 = tpu.matmul %6, %7, %cst_8 {dimension_numbers = #tpu.dot_dimension_numbers<[1], [0], [0], [1], [0, 0, 1, 1], [], []>} : vector<32x256xbf16>, vector<256x256xbf16>, vector<32x256xf32> -> vector<32x256xf32>
    %9 = arith.truncf %8 : vector<32x256xf32> to vector<32x256xbf16>
    %10 = tpu.concatenate %4, %9 in 1 : vector<32x256xbf16>, vector<32x256xbf16> -> vector<32x512xbf16>
    %c0_9 = arith.constant 0 : index
    %c0_10 = arith.constant 0 : index
    %11 = vector.load %arg3[%c0_9, %c0_10] : memref<64x32xbf16, #tpu.memory_space<vmem>>, vector<64x32xbf16>
    %cst_11 = arith.constant dense<0.000000e+00> : vector<64x512xf32>
    %12 = tpu.matmul %11, %10, %cst_11 {dimension_numbers = #tpu.dot_dimension_numbers<[1], [0], [0], [1], [0, 0, 1, 1], [], []>} : vector<64x32xbf16>, vector<32x512xbf16>, vector<64x512xf32> -> vector<64x512xf32>
    %c0_12 = arith.constant 0 : index
    %c0_13 = arith.constant 0 : index
    %13 = vector.load %arg4[%c0_12, %c0_13] : memref<64x1xf32, #tpu.memory_space<vmem>>, vector<64x1xf32>
    %14 = vector.broadcast %13 : vector<64x1xf32> to vector<64x512xf32>
    %15 = arith.addf %12, %14 : vector<64x512xf32>
    %16 = vector.extract_strided_slice %15 {offsets = [0, 0], sizes = [32, 512], strides = [1, 1]} : vector<64x512xf32> to vector<32x512xf32>
    %cst_14 = arith.constant 0.000000e+00 : f32
    %17 = vector.broadcast %cst_14 : f32 to vector<32x512xf32>
    %18 = arith.maximumf %16, %17 : vector<32x512xf32>
    %19 = vector.extract_strided_slice %15 {offsets = [32, 0], sizes = [32, 512], strides = [1, 1]} : vector<64x512xf32> to vector<32x512xf32>
    %20 = tpu.iota {dimensions = array<i32: 1>} : vector<1x256xi32>
    %c250_i32 = arith.constant 250 : i32
    %21 = vector.broadcast %c250_i32 : i32 to vector<1x256xi32>
    %22 = arith.cmpi slt, %20, %21 : vector<1x256xi32>
    %cst_15 = arith.constant 0.000000e+00 : f32
    %cst_16 = arith.constant -1.000000e+30 : f32
    %23 = vector.broadcast %cst_15 : f32 to vector<1x256xf32>
    %24 = vector.broadcast %cst_16 : f32 to vector<1x256xf32>
    %25 = arith.select %22, %23, %24 : vector<1x256xi1>, vector<1x256xf32>
    %c0_17 = arith.constant 0 : index
    %c0_18 = arith.constant 0 : index
    %c0_19 = arith.constant 0 : index
    %26 = vector.load %arg0[%c0_17, %c0_18, %c0_19] : memref<2x8x32xf32, #tpu.memory_space<vmem>>, vector<1x8x32xf32>
    %27 = vector.shape_cast %26 : vector<1x8x32xf32> to vector<8x32xf32>
    %c0_20 = arith.constant 0 : index
    %c0_21 = arith.constant 0 : index
    %28 = vector.load %arg5[%c0_20, %c0_21] : memref<8x4xf32, #tpu.memory_space<vmem>>, vector<8x1xf32>
    %29 = vector.broadcast %28 : vector<8x1xf32> to vector<8x32xf32>
    %30 = arith.mulf %27, %29 : vector<8x32xf32>
    %c0_22 = arith.constant 0 : index
    %c1_23 = arith.constant 1 : index
    %31 = vector.load %arg5[%c0_22, %c1_23] : memref<8x4xf32, #tpu.memory_space<vmem>>, vector<8x1xf32>
    %32 = vector.broadcast %31 : vector<8x1xf32> to vector<8x32xf32>
    %33 = arith.addf %30, %32 : vector<8x32xf32>
    %cst_24 = arith.constant 0.000000e+00 : f32
    %34 = vector.broadcast %cst_24 : f32 to vector<8x32xf32>
    %35 = arith.maximumf %33, %34 : vector<8x32xf32>
    %36 = vector.extract_strided_slice %18 {offsets = [0, 0], sizes = [32, 256], strides = [1, 1]} : vector<32x512xf32> to vector<32x256xf32>
    %37 = vector.extract_strided_slice %19 {offsets = [0, 0], sizes = [32, 256], strides = [1, 1]} : vector<32x512xf32> to vector<32x256xf32>
    %cst_25 = arith.constant dense<0.000000e+00> : vector<8x256xf32>
    %38 = tpu.matmul %35, %36, %cst_25 {dimension_numbers = #tpu.dot_dimension_numbers<[1], [0], [0], [1], [0, 0, 1, 1], [], []>} : vector<8x32xf32>, vector<32x256xf32>, vector<8x256xf32> -> vector<8x256xf32>
    %39 = vector.broadcast %25 : vector<1x256xf32> to vector<8x256xf32>
    %40 = arith.addf %38, %39 : vector<8x256xf32>
    %cst_26 = arith.constant dense<0xFF800000> : vector<8xf32>
    %41 = vector.multi_reduction <maximumf>, %40, %cst_26 [1] : vector<8x256xf32> to vector<8xf32>
    %42 = vector.shape_cast %41 : vector<8xf32> to vector<8x1xf32>
    %43 = vector.broadcast %42 : vector<8x1xf32> to vector<8x256xf32>
    %44 = arith.subf %40, %43 : vector<8x256xf32>
    %45 = math.exp %44 : vector<8x256xf32>
    %cst_27 = arith.constant dense<0.000000e+00> : vector<8xf32>
    %46 = vector.multi_reduction <add>, %45, %cst_27 [1] : vector<8x256xf32> to vector<8xf32>
    %47 = vector.shape_cast %46 : vector<8xf32> to vector<8x1xf32>
    %48 = tpu.reciprocal %47 {approx = true} : vector<8x1xf32> -> vector<8x1xf32>
    %49 = vector.broadcast %48 : vector<8x1xf32> to vector<8x256xf32>
    %50 = arith.mulf %45, %49 : vector<8x256xf32>
    %cst_28 = arith.constant dense<0.000000e+00> : vector<8x32xf32>
    %51 = tpu.matmul %50, %37, %cst_28 {dimension_numbers = #tpu.dot_dimension_numbers<[1], [1], [0], [0], [0, 0, 1, 0], [], []>} : vector<8x256xf32>, vector<32x256xf32>, vector<8x32xf32> -> vector<8x32xf32>
    %c0_29 = arith.constant 0 : index
    %c2 = arith.constant 2 : index
    %52 = vector.load %arg5[%c0_29, %c2] : memref<8x4xf32, #tpu.memory_space<vmem>>, vector<8x1xf32>
    %53 = vector.broadcast %52 : vector<8x1xf32> to vector<8x32xf32>
    %54 = arith.mulf %51, %53 : vector<8x32xf32>
    %c0_30 = arith.constant 0 : index
    %c3 = arith.constant 3 : index
    %55 = vector.load %arg5[%c0_30, %c3] : memref<8x4xf32, #tpu.memory_space<vmem>>, vector<8x1xf32>
    %56 = vector.broadcast %55 : vector<8x1xf32> to vector<8x32xf32>
    %57 = arith.addf %54, %56 : vector<8x32xf32>
    %c0_31 = arith.constant 0 : index
    %c0_32 = arith.constant 0 : index
    %c0_33 = arith.constant 0 : index
    %58 = vector.load %arg6[%c0_31, %c0_32, %c0_33] : memref<2x8x32xf32, #tpu.memory_space<vmem>>, vector<1x8x32xf32>
    %59 = vector.shape_cast %58 : vector<1x8x32xf32> to vector<8x32xf32>
    %60 = vector.shape_cast %57 : vector<8x32xf32> to vector<1x8x32xf32>
    tpu.vector_store %arg6[%c0_31, %c0_32, %c0_33], %60 {strides = array<i32>} : memref<2x8x32xf32, #tpu.memory_space<vmem>>, vector<1x8x32xf32>,
    %c1_34 = arith.constant 1 : index
    %c0_35 = arith.constant 0 : index
    %c0_36 = arith.constant 0 : index
    %61 = vector.load %arg0[%c1_34, %c0_35, %c0_36] : memref<2x8x32xf32, #tpu.memory_space<vmem>>, vector<1x8x32xf32>
    %62 = vector.shape_cast %61 : vector<1x8x32xf32> to vector<8x32xf32>
    %c0_37 = arith.constant 0 : index
    %c0_38 = arith.constant 0 : index
    %63 = vector.load %arg5[%c0_37, %c0_38] : memref<8x4xf32, #tpu.memory_space<vmem>>, vector<8x1xf32>
    %64 = vector.broadcast %63 : vector<8x1xf32> to vector<8x32xf32>
    %65 = arith.mulf %62, %64 : vector<8x32xf32>
    %c0_39 = arith.constant 0 : index
    %c1_40 = arith.constant 1 : index
    %66 = vector.load %arg5[%c0_39, %c1_40] : memref<8x4xf32, #tpu.memory_space<vmem>>, vector<8x1xf32>
    %67 = vector.broadcast %66 : vector<8x1xf32> to vector<8x32xf32>
    %68 = arith.addf %65, %67 : vector<8x32xf32>
    %cst_41 = arith.constant 0.000000e+00 : f32
    %69 = vector.broadcast %cst_41 : f32 to vector<8x32xf32>
    %70 = arith.maximumf %68, %69 : vector<8x32xf32>
    %71 = vector.extract_strided_slice %18 {offsets = [0, 256], sizes = [32, 256], strides = [1, 1]} : vector<32x512xf32> to vector<32x256xf32>
    %72 = vector.extract_strided_slice %19 {offsets = [0, 256], sizes = [32, 256], strides = [1, 1]} : vector<32x512xf32> to vector<32x256xf32>
    %cst_42 = arith.constant dense<0.000000e+00> : vector<8x256xf32>
    %73 = tpu.matmul %70, %71, %cst_42 {dimension_numbers = #tpu.dot_dimension_numbers<[1], [0], [0], [1], [0, 0, 1, 1], [], []>} : vector<8x32xf32>, vector<32x256xf32>, vector<8x256xf32> -> vector<8x256xf32>
    %74 = vector.broadcast %25 : vector<1x256xf32> to vector<8x256xf32>
    %75 = arith.addf %73, %74 : vector<8x256xf32>
    %cst_43 = arith.constant dense<0xFF800000> : vector<8xf32>
    %76 = vector.multi_reduction <maximumf>, %75, %cst_43 [1] : vector<8x256xf32> to vector<8xf32>
    %77 = vector.shape_cast %76 : vector<8xf32> to vector<8x1xf32>
    %78 = vector.broadcast %77 : vector<8x1xf32> to vector<8x256xf32>
    %79 = arith.subf %75, %78 : vector<8x256xf32>
    %80 = math.exp %79 : vector<8x256xf32>
    %cst_44 = arith.constant dense<0.000000e+00> : vector<8xf32>
    %81 = vector.multi_reduction <add>, %80, %cst_44 [1] : vector<8x256xf32> to vector<8xf32>
    %82 = vector.shape_cast %81 : vector<8xf32> to vector<8x1xf32>
    %83 = tpu.reciprocal %82 {approx = true} : vector<8x1xf32> -> vector<8x1xf32>
    %84 = vector.broadcast %83 : vector<8x1xf32> to vector<8x256xf32>
    %85 = arith.mulf %80, %84 : vector<8x256xf32>
    %cst_45 = arith.constant dense<0.000000e+00> : vector<8x32xf32>
    %86 = tpu.matmul %85, %72, %cst_45 {dimension_numbers = #tpu.dot_dimension_numbers<[1], [1], [0], [0], [0, 0, 1, 0], [], []>} : vector<8x256xf32>, vector<32x256xf32>, vector<8x32xf32> -> vector<8x32xf32>
    %c0_46 = arith.constant 0 : index
    %c2_47 = arith.constant 2 : index
    %87 = vector.load %arg5[%c0_46, %c2_47] : memref<8x4xf32, #tpu.memory_space<vmem>>, vector<8x1xf32>
    %88 = vector.broadcast %87 : vector<8x1xf32> to vector<8x32xf32>
    %89 = arith.mulf %86, %88 : vector<8x32xf32>
    %c0_48 = arith.constant 0 : index
    %c3_49 = arith.constant 3 : index
    %90 = vector.load %arg5[%c0_48, %c3_49] : memref<8x4xf32, #tpu.memory_space<vmem>>, vector<8x1xf32>
    %91 = vector.broadcast %90 : vector<8x1xf32> to vector<8x32xf32>
    %92 = arith.addf %89, %91 : vector<8x32xf32>
    %c1_50 = arith.constant 1 : index
    %c0_51 = arith.constant 0 : index
    %c0_52 = arith.constant 0 : index
    %93 = vector.load %arg6[%c1_50, %c0_51, %c0_52] : memref<2x8x32xf32, #tpu.memory_space<vmem>>, vector<1x8x32xf32>
    %94 = vector.shape_cast %93 : vector<1x8x32xf32> to vector<8x32xf32>
    %95 = vector.shape_cast %92 : vector<8x32xf32> to vector<1x8x32xf32>
    tpu.vector_store %arg6[%c1_50, %c0_51, %c0_52], %95 {strides = array<i32>} : memref<2x8x32xf32, #tpu.memory_space<vmem>>, vector<1x8x32xf32>,
    return
  }
}

</mosaic_0001>

<llo_original>
// kernel: tpu_custom_call.1
$region0: #{tpu_custom_call.1}
  #allocation0 [shape = 'u32[]', space=smem, size = 0x4, offset = 0x4, fixed_abs, tag = 'smem constant byte address 0x4 - core index']
  #allocation1 [shape = 'u32[144,128]{1,0:T(1,128)}', space=vmem, size = 0x12000, scoped, tag = 'internal scratch']
  %s0 = inlined_call_operand.vmem [shape: f32[2,8,32], index: 0, kind: input, shape index: {}]
  %s1 = inlined_call_operand.vmem [shape: bf16[2,32,256], index: 1, kind: input, shape index: {}]
  %s2 = inlined_call_operand.hbm [shape: bf16[256,256], index: 2, kind: input, shape index: {}]
  %s3 = inlined_call_operand.vmem [shape: bf16[64,32], index: 3, kind: input, shape index: {}]
  %s4 = inlined_call_operand.vmem [shape: f32[64,1], index: 4, kind: input, shape index: {}]
  %s5 = inlined_call_operand.vmem [shape: f32[8,4], index: 5, kind: input, shape index: {}]
  %s6 = inlined_call_operand.hbm [shape: f32[2,8,32], index: 6, kind: output, shape index: {}]
  %s7 = sld [smem:[#allocation0]]
  $region38: #{tpu_custom_call.1} parent=0
    _
  %s9 = ssub.s32 1, %s7
  %s10 = scalar_select 0, %s9, %s7
  $region1: #{tpu_custom_call.1} parent=0
    #allocation2 [shape = 'u8[131072]{0}', space=vmem, size = 0x20000, scoped, tag = 'input window, operand 2, single buffered']
    #allocation3 [shape = 's32[1]{0}', space=sflag, size = 0x4, scoped, tag = 'scoped memory for tpu_custom_call.1']
    #allocation4 [shape = 's32[1]{0}', space=sflag, size = 0x4, scoped, tag = 'scoped memory for tpu_custom_call.1']
    #allocation5 [shape = 'u8[8192]{0}', space=vmem, size = 0x2000, scoped, tag = 'output window, operand 0, single buffered']
    %11 = vsyncpa [#allocation3], 0
    %12 = vsyncpa [#allocation4], 0
    // Predicated region
    $region2: #{tpu_custom_call.1} parent=1 // pred_check
      _
    $region3: #{tpu_custom_call.1} parent=1 // pred_check_branch
      %14 = sbr.rel (0) target = $region5
    $region4: #{tpu_custom_call.1} parent=1 // pred_region
      _
    $region5: #{tpu_custom_call.1} parent=1 // pred_fallthru
      _
    // Predicated region
    $region6: #{tpu_custom_call.1} parent=1 // pred_check
      _
    $region7: #{tpu_custom_call.1} parent=1 // pred_check_branch
      %16 = sbr.rel (0) target = $region9
    $region8: #{tpu_custom_call.1} parent=1 // pred_region
      _
    $region9: #{tpu_custom_call.1} parent=1 // pred_fallthru
      _
    // Predicated region
    $region10: #{tpu_custom_call.1} parent=1 // pred_check
      _
    $region11: #{tpu_custom_call.1} parent=1 // pred_check_branch
      %18 = sbr.rel (0) target = $region13
    $region12: #{tpu_custom_call.1} parent=1 // pred_region
      %s20 = ssub.s32 4096, 4096
      %21 = vsyncadd [#allocation3], %s20
      %s22 = sshll.u32 [#allocation2], 4
      %s23 = int_to_ptr.vmem [resolvable:$true] %s22
      %28 = dma.hbm_to_vmem [thread:$0]  %s2, 4096, %s23, [#allocation3], 128, 128, 8
    $region13: #{tpu_custom_call.1} parent=1 // pred_fallthru
      _
    // Predicated region
    $region14: #{tpu_custom_call.1} parent=1 // pred_check
      _
    $region15: #{tpu_custom_call.1} parent=1 // pred_check_branch
      %30 = sbr.rel (0) target = $region17
    $region16: #{tpu_custom_call.1} parent=1 // pred_region
      _
    $region17: #{tpu_custom_call.1} parent=1 // pred_fallthru
      _
    // Predicated region
    $region18: #{tpu_custom_call.1} parent=1 // pred_check
      _
    $region19: #{tpu_custom_call.1} parent=1 // pred_check_branch
      %32 = sbr.rel (0) target = $region21
    $region20: #{tpu_custom_call.1} parent=1 // pred_region
      _
    $region21: #{tpu_custom_call.1} parent=1 // pred_fallthru
      _
    // Predicated region
    $region22: #{tpu_custom_call.1} parent=1 // pred_check
      _
    $region23: #{tpu_custom_call.1} parent=1 // pred_check_branch
      %34 = sbr.rel (0) target = $region25
    $region24: #{tpu_custom_call.1} parent=1 // pred_region
      _
    $region25: #{tpu_custom_call.1} parent=1 // pred_fallthru
      _
    // Predicated region
    $region26: #{tpu_custom_call.1} parent=1 // pred_check
      _
    $region27: #{tpu_custom_call.1} parent=1 // pred_check_branch
      %36 = sbr.rel (0) target = $region29
    $region28: #{tpu_custom_call.1} parent=1 // pred_region
      %37 = dma.done [#allocation3], 4096
    $region29: #{tpu_custom_call.1} parent=1 // pred_fallthru
      _
    %v39 = vld [vmem:[%s1] sm:$0xff]
    %v40 = vld [vmem:[%s1 + $0x8] sm:$0xff]
    %v41 = vld [vmem:[%s1 + $0x10] sm:$0xff]
    %v42 = vld [vmem:[%s1 + $0x18] sm:$0xff]
    %v43 = vld [vmem:[#allocation2] sm:$0xff]
    %v44 = vld [vmem:[#allocation2 + $0x8] sm:$0xff]
    %v45 = vld [vmem:[#allocation2 + $0x10] sm:$0xff]
    %v46 = vld [vmem:[#allocation2 + $0x18] sm:$0xff]
    %v47 = vld [vmem:[#allocation2 + $0x20] sm:$0xff]
    %v48 = vld [vmem:[#allocation2 + $0x28] sm:$0xff]
    %v49 = vld [vmem:[#allocation2 + $0x30] sm:$0xff]
    %v50 = vld [vmem:[#allocation2 + $0x38] sm:$0xff]
    %v51 = vld [vmem:[#allocation2 + $0x40] sm:$0xff]
    %v52 = vld [vmem:[#allocation2 + $0x48] sm:$0xff]
    %v53 = vld [vmem:[#allocation2 + $0x50] sm:$0xff]
    %v54 = vld [vmem:[#allocation2 + $0x58] sm:$0xff]
    %v55 = vld [vmem:[#allocation2 + $0x60] sm:$0xff]
    %v56 = vld [vmem:[#allocation2 + $0x68] sm:$0xff]
    %v57 = vld [vmem:[#allocation2 + $0x70] sm:$0xff]
    %v58 = vld [vmem:[#allocation2 + $0x78] sm:$0xff]
    %v59 = vld [vmem:[#allocation2 + $0x80] sm:$0xff]
    %v60 = vld [vmem:[#allocation2 + $0x88] sm:$0xff]
    %v61 = vld [vmem:[#allocation2 + $0x90] sm:$0xff]
    %v62 = vld [vmem:[#allocation2 + $0x98] sm:$0xff]
    %v63 = vld [vmem:[#allocation2 + $0xa0] sm:$0xff]
    %v64 = vld [vmem:[#allocation2 + $0xa8] sm:$0xff]
    %v65 = vld [vmem:[#allocation2 + $0xb0] sm:$0xff]
    %v66 = vld [vmem:[#allocation2 + $0xb8] sm:$0xff]
    %v67 = vld [vmem:[#allocation2 + $0xc0] sm:$0xff]
    %v68 = vld [vmem:[#allocation2 + $0xc8] sm:$0xff]
    %v69 = vld [vmem:[#allocation2 + $0xd0] sm:$0xff]
    %v70 = vld [vmem:[#allocation2 + $0xd8] sm:$0xff]
    %v71 = vld [vmem:[#allocation2 + $0xe0] sm:$0xff]
    %v72 = vld [vmem:[#allocation2 + $0xe8] sm:$0xff]
    %v73 = vld [vmem:[#allocation2 + $0xf0] sm:$0xff]
    %v74 = vld [vmem:[#allocation2 + $0xf8] sm:$0xff]
    %v79 = vunpack.c.l.b16 %v39
    %v80 = vunpack.c.h.b16 %v39
    %v81 = vunpack.c.l.b16 %v40
    %v82 = vunpack.c.h.b16 %v40
    %v83 = vunpack.c.l.b16 %v41
    %v84 = vunpack.c.h.b16 %v41
    %v85 = vunpack.c.l.b16 %v42
    %v86 = vunpack.c.h.b16 %v42
    %v87 = vpack.c.b16 %v81, %v79
    %v88 = vpack.c.b16 %v82, %v80
    %v89 = vpack.c.b16 %v85, %v83
    %v90 = vpack.c.b16 %v86, %v84
    %v127 = vunpack.c.l.b16 %v43
    %v128 = vunpack.c.h.b16 %v43
    %v129 = vunpack.c.l.b16 %v44
    %v130 = vunpack.c.h.b16 %v44
    %v131 = vunpack.c.l.b16 %v45
    %v132 = vunpack.c.h.b16 %v45
    %v133 = vunpack.c.l.b16 %v46
    %v134 = vunpack.c.h.b16 %v46
    %v135 = vunpack.c.l.b16 %v47
    %v136 = vunpack.c.h.b16 %v47
    %v137 = vunpack.c.l.b16 %v48
    %v138 = vunpack.c.h.b16 %v48
    %v139 = vunpack.c.l.b16 %v49
    %v140 = vunpack.c.h.b16 %v49
    %v141 = vunpack.c.l.b16 %v50
    %v142 = vunpack.c.h.b16 %v50
    %v143 = vunpack.c.l.b16 %v51
    %v144 = vunpack.c.h.b16 %v51
    %v145 = vunpack.c.l.b16 %v52
    %v146 = vunpack.c.h.b16 %v52
    %v147 = vunpack.c.l.b16 %v53
    %v148 = vunpack.c.h.b16 %v53
    %v149 = vunpack.c.l.b16 %v54
    %v150 = vunpack.c.h.b16 %v54
    %v151 = vunpack.c.l.b16 %v55
    %v152 = vunpack.c.h.b16 %v55
    %v153 = vunpack.c.l.b16 %v56
    %v154 = vunpack.c.h.b16 %v56
    %v155 = vunpack.c.l.b16 %v57
    %v156 = vunpack.c.h.b16 %v57
    %v157 = vunpack.c.l.b16 %v58
    %v158 = vunpack.c.h.b16 %v58
    %v159 = vunpack.c.l.b16 %v59
    %v160 = vunpack.c.h.b16 %v59
    %v161 = vunpack.c.l.b16 %v60
    %v162 = vunpack.c.h.b16 %v60
    %v163 = vunpack.c.l.b16 %v61
    %v164 = vunpack.c.h.b16 %v61
    %v165 = vunpack.c.l.b16 %v62
    %v166 = vunpack.c.h.b16 %v62
    %v167 = vunpack.c.l.b16 %v63
    %v168 = vunpack.c.h.b16 %v63
    %v169 = vunpack.c.l.b16 %v64
    %v170 = vunpack.c.h.b16 %v64
    %v171 = vunpack.c.l.b16 %v65
    %v172 = vunpack.c.h.b16 %v65
    %v173 = vunpack.c.l.b16 %v66
    %v174 = vunpack.c.h.b16 %v66
    %v175 = vunpack.c.l.b16 %v67
    %v176 = vunpack.c.h.b16 %v67
    %v177 = vunpack.c.l.b16 %v68
    %v178 = vunpack.c.h.b16 %v68
    %v179 = vunpack.c.l.b16 %v69
    %v180 = vunpack.c.h.b16 %v69
    %v181 = vunpack.c.l.b16 %v70
    %v182 = vunpack.c.h.b16 %v70
    %v183 = vunpack.c.l.b16 %v71
    %v184 = vunpack.c.h.b16 %v71
    %v185 = vunpack.c.l.b16 %v72
    %v186 = vunpack.c.h.b16 %v72
    %v187 = vunpack.c.l.b16 %v73
    %v188 = vunpack.c.h.b16 %v73
    %v189 = vunpack.c.l.b16 %v74
    %v190 = vunpack.c.h.b16 %v74
    %v191 = vpack.c.b16 %v129, %v127
    %v192 = vpack.c.b16 %v130, %v128
    %v193 = vpack.c.b16 %v133, %v131
    %v194 = vpack.c.b16 %v134, %v132
    %v195 = vpack.c.b16 %v137, %v135
    %v196 = vpack.c.b16 %v138, %v136
    %v197 = vpack.c.b16 %v141, %v139
    %v198 = vpack.c.b16 %v142, %v140
    %v199 = vpack.c.b16 %v145, %v143
    %v200 = vpack.c.b16 %v146, %v144
    %v201 = vpack.c.b16 %v149, %v147
    %v202 = vpack.c.b16 %v150, %v148
    %v203 = vpack.c.b16 %v153, %v151
    %v204 = vpack.c.b16 %v154, %v152
    %v205 = vpack.c.b16 %v157, %v155
    %v206 = vpack.c.b16 %v158, %v156
    %v207 = vpack.c.b16 %v161, %v159
    %v208 = vpack.c.b16 %v162, %v160
    %v209 = vpack.c.b16 %v165, %v163
    %v210 = vpack.c.b16 %v166, %v164
    %v211 = vpack.c.b16 %v169, %v167
    %v212 = vpack.c.b16 %v170, %v168
    %v213 = vpack.c.b16 %v173, %v171
    %v214 = vpack.c.b16 %v174, %v172
    %v215 = vpack.c.b16 %v177, %v175
    %v216 = vpack.c.b16 %v178, %v176
    %v217 = vpack.c.b16 %v181, %v179
    %v218 = vpack.c.b16 %v182, %v180
    %v219 = vpack.c.b16 %v185, %v183
    %v220 = vpack.c.b16 %v186, %v184
    %v221 = vpack.c.b16 %v189, %v187
    %v222 = vpack.c.b16 %v190, %v188
    %255 = vmatprep.subr.bf16.mxu0 %v192
    %256 = vmatpush1.bf16.msra.mxu0 %v191
    %257 = vmatprep.subr.bf16.mxu0 %v194
    %258 = vmatpush1.bf16.msra.mxu0 %v193
    %259 = vmatprep.subr.bf16.mxu0 %v196
    %260 = vmatpush1.bf16.msra.mxu0 %v195
    %261 = vmatprep.subr.bf16.mxu0 %v198
    %262 = vmatpush1.bf16.msra.mxu0 %v197
    %263 = vmatprep.subr.bf16.mxu0 %v200
    %264 = vmatpush1.bf16.msra.mxu0 %v199
    %265 = vmatprep.subr.bf16.mxu0 %v202
    %266 = vmatpush1.bf16.msra.mxu0 %v201
    %267 = vmatprep.subr.bf16.mxu0 %v204
    %268 = vmatpush1.bf16.msra.mxu0 %v203
    %269 = vmatprep.subr.bf16.mxu0 %v206
    %270 = vmatpush1.bf16.msra.mxu0 %v205
    %271 = vmatprep.subr.bf16.mxu0 %v208
    %272 = vmatpush1.bf16.msra.mxu0 %v207
    %273 = vmatprep.subr.bf16.mxu0 %v210
    %274 = vmatpush1.bf16.msra.mxu0 %v209
    %275 = vmatprep.subr.bf16.mxu0 %v212
    %276 = vmatpush1.bf16.msra.mxu0 %v211
    %277 = vmatprep.subr.bf16.mxu0 %v214
    %278 = vmatpush1.bf16.msra.mxu0 %v213
    %279 = vmatprep.subr.bf16.mxu0 %v216
    %280 = vmatpush1.bf16.msra.mxu0 %v215
    %281 = vmatprep.subr.bf16.mxu0 %v218
    %282 = vmatpush1.bf16.msra.mxu0 %v217
    %283 = vmatprep.subr.bf16.mxu0 %v220
    %284 = vmatpush1.bf16.msra.mxu0 %v219
    %285 = vmatprep.subr.bf16.mxu0 %v222
    %286 = vmatpush1.bf16.msra.mxu0 %v221
    %287 = vmatprep.mubr.bf16.mxu0 %v88
    %288 = vmatmul.mubr.bf16.gmra.mrb[0].mxu0 %v87
    %v289 = vpop.f32.mrb[0].mxu0
    %v290 = vadd.f32 0.0, %v289
    %v291 = vpop.f32.mrb[0].mxu0
    %v292 = vadd.f32 0.0, %v291
    %v293 = vpop.f32.mrb[0].mxu0
    %v294 = vadd.f32 0.0, %v293
    %v295 = vpop.f32.mrb[0].mxu0
    %v296 = vadd.f32 0.0, %v295
    %297 = vmatprep.mubr.bf16.mxu0 %v90
    %298 = vmatmul.mubr.bf16.gmra.mrb[0].mxu0 %v89
    %v299 = vpop.f32.mrb[0].mxu0
    %v300 = vadd.f32 0.0, %v299
    %v301 = vpop.f32.mrb[0].mxu0
    %v302 = vadd.f32 0.0, %v301
    %v303 = vpop.f32.mrb[0].mxu0
    %v304 = vadd.f32 0.0, %v303
    %v305 = vpop.f32.mrb[0].mxu0
    %v306 = vadd.f32 0.0, %v305
    %307 = vdwg.mxu0
    %v308 = vpack.c.bf16 %v294, %v290
    %v309 = vpack.c.bf16 %v296, %v292
    %v310 = vpack.c.bf16 %v304, %v300
    %v311 = vpack.c.bf16 %v306, %v302
    %s312 = scalar_lea.vmem %s1, 32
    %v313 = vld [vmem:[%s312] sm:$0xff]
    %v314 = vld [vmem:[%s312 + $0x8] sm:$0xff]
    %v315 = vld [vmem:[%s312 + $0x10] sm:$0xff]
    %v316 = vld [vmem:[%s312 + $0x18] sm:$0xff]
    %v321 = vunpack.c.l.b16 %v313
    %v322 = vunpack.c.h.b16 %v313
    %v323 = vunpack.c.l.b16 %v314
    %v324 = vunpack.c.h.b16 %v314
    %v325 = vunpack.c.l.b16 %v315
    %v326 = vunpack.c.h.b16 %v315
    %v327 = vunpack.c.l.b16 %v316
    %v328 = vunpack.c.h.b16 %v316
    %v329 = vpack.c.b16 %v323, %v321
    %v330 = vpack.c.b16 %v324, %v322
    %v331 = vpack.c.b16 %v327, %v325
    %v332 = vpack.c.b16 %v328, %v326
    %337 = vmatprep.subr.bf16.mxu0 %v192
    %338 = vmatpush1.bf16.msra.mxu0 %v191
    %339 = vmatprep.subr.bf16.mxu0 %v194
    %340 = vmatpush1.bf16.msra.mxu0 %v193
    %341 = vmatprep.subr.bf16.mxu0 %v196
    %342 = vmatpush1.bf16.msra.mxu0 %v195
    %343 = vmatprep.subr.bf16.mxu0 %v198
    %344 = vmatpush1.bf16.msra.mxu0 %v197
    %345 = vmatprep.subr.bf16.mxu0 %v200
    %346 = vmatpush1.bf16.msra.mxu0 %v199
    %347 = vmatprep.subr.bf16.mxu0 %v202
    %348 = vmatpush1.bf16.msra.mxu0 %v201
    %349 = vmatprep.subr.bf16.mxu0 %v204
    %350 = vmatpush1.bf16.msra.mxu0 %v203
    %351 = vmatprep.subr.bf16.mxu0 %v206
    %352 = vmatpush1.bf16.msra.mxu0 %v205
    %353 = vmatprep.subr.bf16.mxu0 %v208
    %354 = vmatpush1.bf16.msra.mxu0 %v207
    %355 = vmatprep.subr.bf16.mxu0 %v210
    %356 = vmatpush1.bf16.msra.mxu0 %v209
    %357 = vmatprep.subr.bf16.mxu0 %v212
    %358 = vmatpush1.bf16.msra.mxu0 %v211
    %359 = vmatprep.subr.bf16.mxu0 %v214
    %360 = vmatpush1.bf16.msra.mxu0 %v213
    %361 = vmatprep.subr.bf16.mxu0 %v216
    %362 = vmatpush1.bf16.msra.mxu0 %v215
    %363 = vmatprep.subr.bf16.mxu0 %v218
    %364 = vmatpush1.bf16.msra.mxu0 %v217
    %365 = vmatprep.subr.bf16.mxu0 %v220
    %366 = vmatpush1.bf16.msra.mxu0 %v219
    %367 = vmatprep.subr.bf16.mxu0 %v222
    %368 = vmatpush1.bf16.msra.mxu0 %v221
    %369 = vmatprep.mubr.bf16.mxu0 %v330
    %370 = vmatmul.mubr.bf16.gmra.mrb[0].mxu0 %v329
    %v371 = vpop.f32.mrb[0].mxu0
    %v372 = vadd.f32 0.0, %v371
    %v373 = vpop.f32.mrb[0].mxu0
    %v374 = vadd.f32 0.0, %v373
    %v375 = vpop.f32.mrb[0].mxu0
    %v376 = vadd.f32 0.0, %v375
    %v377 = vpop.f32.mrb[0].mxu0
    %v378 = vadd.f32 0.0, %v377
    %379 = vmatprep.mubr.bf16.mxu0 %v332
    %380 = vmatmul.mubr.bf16.gmra.mrb[0].mxu0 %v331
    %v381 = vpop.f32.mrb[0].mxu0
    %v382 = vadd.f32 0.0, %v381
    %v383 = vpop.f32.mrb[0].mxu0
    %v384 = vadd.f32 0.0, %v383
    %v385 = vpop.f32.mrb[0].mxu0
    %v386 = vadd.f32 0.0, %v385
    %v387 = vpop.f32.mrb[0].mxu0
    %v388 = vadd.f32 0.0, %v387
    %389 = vdwg.mxu0
    %v390 = vpack.c.bf16 %v376, %v372
    %v391 = vpack.c.bf16 %v378, %v374
    %v392 = vpack.c.bf16 %v386, %v382
    %v393 = vpack.c.bf16 %v388, %v384
    %v394 = vld [vmem:[%s3] sm:$0xf]
    %v395 = vld [vmem:[%s3 + $0x4] sm:$0xf]
    %v396 = vld [vmem:[%s3 + $0x8] sm:$0xf]
    %v397 = vld [vmem:[%s3 + $0xc] sm:$0xf]
    %v398 = vld [vmem:[%s3 + $0x10] sm:$0xf]
    %v399 = vld [vmem:[%s3 + $0x14] sm:$0xf]
    %v400 = vld [vmem:[%s3 + $0x18] sm:$0xf]
    %v401 = vld [vmem:[%s3 + $0x1c] sm:$0xf]
    %v402 = vld [vmem:[%s4] sm:$0xff]
    %v403 = vld [vmem:[%s4 + $0x8] sm:$0xff]
    %v404 = vld [vmem:[%s4 + $0x10] sm:$0xff]
    %v405 = vld [vmem:[%s4 + $0x18] sm:$0xff]
    %v406 = vld [vmem:[%s4 + $0x20] sm:$0xff]
    %v407 = vld [vmem:[%s4 + $0x28] sm:$0xff]
    %v408 = vld [vmem:[%s4 + $0x30] sm:$0xff]
    %v409 = vld [vmem:[%s4 + $0x38] sm:$0xff]
    %411 = vset.pattern.permute.xlu0 0
    %412 = vperm.xlu0 %411, %v402
    %v413 = vpop.permute.xlu0 %412
    %416 = vset.pattern.permute.xlu0 0
    %417 = vperm.xlu0 %416, %v403
    %v418 = vpop.permute.xlu0 %417
    %421 = vset.pattern.permute.xlu0 0
    %422 = vperm.xlu0 %421, %v404
    %v423 = vpop.permute.xlu0 %422
    %426 = vset.pattern.permute.xlu0 0
    %427 = vperm.xlu0 %426, %v405
    %v428 = vpop.permute.xlu0 %427
    %431 = vset.pattern.permute.xlu0 0
    %432 = vperm.xlu0 %431, %v406
    %v433 = vpop.permute.xlu0 %432
    %436 = vset.pattern.permute.xlu0 0
    %437 = vperm.xlu0 %436, %v407
    %v438 = vpop.permute.xlu0 %437
    %441 = vset.pattern.permute.xlu0 0
    %442 = vperm.xlu0 %441, %v408
    %v443 = vpop.permute.xlu0 %442
    %446 = vset.pattern.permute.xlu0 0
    %447 = vperm.xlu0 %446, %v409
    %v448 = vpop.permute.xlu0 %447
    %v458 = vunpack.c.l.b16 %v394
    %v459 = vunpack.c.l.b16 %v395
    %v460 = vunpack.c.l.b16 %v396
    %v461 = vunpack.c.l.b16 %v397
    %v462 = vunpack.c.l.b16 %v398
    %v463 = vunpack.c.l.b16 %v399
    %v464 = vunpack.c.l.b16 %v400
    %v465 = vunpack.c.l.b16 %v401
    %v466 = vpack.c.b16 %v459, %v458
    %v467 = vpack.c.b16 %v461, %v460
    %v468 = vpack.c.b16 %v463, %v462
    %v469 = vpack.c.b16 %v465, %v464
    %vm470 = vcmask 261120
    %v472 = vsel %vm470, %v466, 0
    %v475 = vsel %vm470, %v467, 0
    %v478 = vsel %vm470, %v468, 0
    %v481 = vsel %vm470, %v469, 0
    %483 = vmatprep.subr.bf16.mxu0 %v309
    %484 = vmatpush1.bf16.msra.mxu0 %v308
    %485 = vmatprep.subr.bf16.mxu0 %v311
    %486 = vmatpush1.bf16.msra.mxu0 %v310
    %487 = vmatprep.subr.bf16.mxu0 0
    %488 = vmatpush1.bf16.msra.mxu0 0
    %489 = vmatprep.subr.bf16.mxu0 0
    %490 = vmatpush1.bf16.msra.mxu0 0
    %491 = vmatprep.subr.bf16.mxu0 0
    %492 = vmatpush1.bf16.msra.mxu0 0
    %493 = vmatprep.subr.bf16.mxu0 0
    %494 = vmatpush1.bf16.msra.mxu0 0
    %495 = vmatprep.subr.bf16.mxu0 0
    %496 = vmatpush1.bf16.msra.mxu0 0
    %497 = vmatprep.subr.bf16.mxu0 0
    %498 = vmatpush1.bf16.msra.mxu0 0
    %499 = vmatprep.subr.bf16.mxu0 0
    %500 = vmatpush1.bf16.msra.mxu0 0
    %501 = vmatprep.subr.bf16.mxu0 0
    %502 = vmatpush1.bf16.msra.mxu0 0
    %503 = vmatprep.subr.bf16.mxu0 0
    %504 = vmatpush1.bf16.msra.mxu0 0
    %505 = vmatprep.subr.bf16.mxu0 0
    %506 = vmatpush1.bf16.msra.mxu0 0
    %507 = vmatprep.subr.bf16.mxu0 0
    %508 = vmatpush1.bf16.msra.mxu0 0
    %509 = vmatprep.subr.bf16.mxu0 0
    %510 = vmatpush1.bf16.msra.mxu0 0
    %511 = vmatprep.subr.bf16.mxu0 0
    %512 = vmatpush1.bf16.msra.mxu0 0
    %513 = vmatprep.subr.bf16.mxu0 0
    %514 = vmatpush1.bf16.msra.mxu0 0
    %515 = vmatprep.mubr.bf16.mxu0 0
    %516 = vmatmul.mubr.bf16.gmra.mrb[0].mxu0 %v472
    %v517 = vpop.f32.mrb[0].mxu0
    %v518 = vadd.f32 %v413, %v517
    %v519 = vpop.f32.mrb[0].mxu0
    %v520 = vadd.f32 %v413, %v519
    %v521 = vpop.f32.mrb[0].mxu0
    %v522 = vadd.f32 %v418, %v521
    %v523 = vpop.f32.mrb[0].mxu0
    %v524 = vadd.f32 %v418, %v523
    %525 = vmatprep.mubr.bf16.mxu0 0
    %526 = vmatmul.mubr.bf16.gmra.mrb[0].mxu0 %v475
    %v527 = vpop.f32.mrb[0].mxu0
    %v528 = vadd.f32 %v423, %v527
    %v529 = vpop.f32.mrb[0].mxu0
    %v530 = vadd.f32 %v423, %v529
    %v531 = vpop.f32.mrb[0].mxu0
    %v532 = vadd.f32 %v428, %v531
    %v533 = vpop.f32.mrb[0].mxu0
    %v534 = vadd.f32 %v428, %v533
    %535 = vmatprep.mubr.bf16.mxu0 0
    %536 = vmatmul.mubr.bf16.gmra.mrb[0].mxu0 %v478
    %v537 = vpop.f32.mrb[0].mxu0
    %v538 = vadd.f32 %v433, %v537
    %v539 = vpop.f32.mrb[0].mxu0
    %v540 = vadd.f32 %v433, %v539
    %v541 = vpop.f32.mrb[0].mxu0
    %v542 = vadd.f32 %v438, %v541
    %v543 = vpop.f32.mrb[0].mxu0
    %v544 = vadd.f32 %v438, %v543
    %545 = vmatprep.mubr.bf16.mxu0 0
    %546 = vmatmul.mubr.bf16.gmra.mrb[0].mxu0 %v481
    %v547 = vpop.f32.mrb[0].mxu0
    %v548 = vadd.f32 %v443, %v547
    %v549 = vpop.f32.mrb[0].mxu0
    %v550 = vadd.f32 %v443, %v549
    %v551 = vpop.f32.mrb[0].mxu0
    %v552 = vadd.f32 %v448, %v551
    %v553 = vpop.f32.mrb[0].mxu0
    %v554 = vadd.f32 %v448, %v553
    %555 = vdwg.mxu0
    %556 = vmatprep.subr.bf16.mxu0 %v391
    %557 = vmatpush1.bf16.msra.mxu0 %v390
    %558 = vmatprep.subr.bf16.mxu0 %v393
    %559 = vmatpush1.bf16.msra.mxu0 %v392
    %560 = vmatprep.subr.bf16.mxu0 0
    %561 = vmatpush1.bf16.msra.mxu0 0
    %562 = vmatprep.subr.bf16.mxu0 0
    %563 = vmatpush1.bf16.msra.mxu0 0
    %564 = vmatprep.subr.bf16.mxu0 0
    %565 = vmatpush1.bf16.msra.mxu0 0
    %566 = vmatprep.subr.bf16.mxu0 0
    %567 = vmatpush1.bf16.msra.mxu0 0
    %568 = vmatprep.subr.bf16.mxu0 0
    %569 = vmatpush1.bf16.msra.mxu0 0
    %570 = vmatprep.subr.bf16.mxu0 0
    %571 = vmatpush1.bf16.msra.mxu0 0
    %572 = vmatprep.subr.bf16.mxu0 0
    %573 = vmatpush1.bf16.msra.mxu0 0
    %574 = vmatprep.subr.bf16.mxu0 0
    %575 = vmatpush1.bf16.msra.mxu0 0
    %576 = vmatprep.subr.bf16.mxu0 0
    %577 = vmatpush1.bf16.msra.mxu0 0
    %578 = vmatprep.subr.bf16.mxu0 0
    %579 = vmatpush1.bf16.msra.mxu0 0
    %580 = vmatprep.subr.bf16.mxu0 0
    %581 = vmatpush1.bf16.msra.mxu0 0
    %582 = vmatprep.subr.bf16.mxu0 0
    %583 = vmatpush1.bf16.msra.mxu0 0
    %584 = vmatprep.subr.bf16.mxu0 0
    %585 = vmatpush1.bf16.msra.mxu0 0
    %586 = vmatprep.subr.bf16.mxu0 0
    %587 = vmatpush1.bf16.msra.mxu0 0
    %588 = vmatprep.mubr.bf16.mxu0 0
    %589 = vmatmul.mubr.bf16.gmra.mrb[0].mxu0 %v472
    %v590 = vpop.f32.mrb[0].mxu0
    %v591 = vadd.f32 %v413, %v590
    %v592 = vpop.f32.mrb[0].mxu0
    %v593 = vadd.f32 %v413, %v592
    %v594 = vpop.f32.mrb[0].mxu0
    %v595 = vadd.f32 %v418, %v594
    %v596 = vpop.f32.mrb[0].mxu0
    %v597 = vadd.f32 %v418, %v596
    %598 = vmatprep.mubr.bf16.mxu0 0
    %599 = vmatmul.mubr.bf16.gmra.mrb[0].mxu0 %v475
    %v600 = vpop.f32.mrb[0].mxu0
    %v601 = vadd.f32 %v423, %v600
    %v602 = vpop.f32.mrb[0].mxu0
    %v603 = vadd.f32 %v423, %v602
    %v604 = vpop.f32.mrb[0].mxu0
    %v605 = vadd.f32 %v428, %v604
    %v606 = vpop.f32.mrb[0].mxu0
    %v607 = vadd.f32 %v428, %v606
    %608 = vmatprep.mubr.bf16.mxu0 0
    %609 = vmatmul.mubr.bf16.gmra.mrb[0].mxu0 %v478
    %v610 = vpop.f32.mrb[0].mxu0
    %v611 = vadd.f32 %v433, %v610
    %v612 = vpop.f32.mrb[0].mxu0
    %v613 = vadd.f32 %v433, %v612
    %v614 = vpop.f32.mrb[0].mxu0
    %v615 = vadd.f32 %v438, %v614
    %v616 = vpop.f32.mrb[0].mxu0
    %v617 = vadd.f32 %v438, %v616
    %618 = vmatprep.mubr.bf16.mxu0 0
    %619 = vmatmul.mubr.bf16.gmra.mrb[0].mxu0 %v481
    %v620 = vpop.f32.mrb[0].mxu0
    %v621 = vadd.f32 %v443, %v620
    %v622 = vpop.f32.mrb[0].mxu0
    %v623 = vadd.f32 %v443, %v622
    %v624 = vpop.f32.mrb[0].mxu0
    %v625 = vadd.f32 %v448, %v624
    %v626 = vpop.f32.mrb[0].mxu0
    %v627 = vadd.f32 %v448, %v626
    %628 = vdwg.mxu0
    %v629 = vmax.f32 %v518, 0.0
    %v630 = vmax.f32 %v520, 0.0
    %v631 = vmax.f32 %v591, 0.0
    %v632 = vmax.f32 %v593, 0.0
    %v633 = vmax.f32 %v522, 0.0
    %v634 = vmax.f32 %v524, 0.0
    %v635 = vmax.f32 %v595, 0.0
    %v636 = vmax.f32 %v597, 0.0
    %v637 = vmax.f32 %v528, 0.0
    %v638 = vmax.f32 %v530, 0.0
    %v639 = vmax.f32 %v601, 0.0
    %v640 = vmax.f32 %v603, 0.0
    %v641 = vmax.f32 %v532, 0.0
    %v642 = vmax.f32 %v534, 0.0
    %v643 = vmax.f32 %v605, 0.0
    %v644 = vmax.f32 %v607, 0.0
    %v645 = vlaneseq
    %v646 = vand.u32 %v645, 127
    %v647 = vadd.s32 %v646, 128
    %vm648 = vcmp.lt.s32.totalorder %v646, 250
    %vm649 = vcmp.lt.s32.totalorder %v647, 250
    %v650 = vsel %vm648, 0.0, -1e+30
    %v651 = vsel %vm649, 0.0, -1e+30
    %v652 = vld [vmem:[%s0] sm:$0xff]
    %v653 = vld [vmem:[%s5] sm:$0xff]
    %655 = vset.pattern.permute.xlu0 0
    %656 = vperm.xlu0 %655, %v653
    %v657 = vpop.permute.xlu0 %656
    %v659 = vmul.f32 %v652, %v657
    %660 = vset.pattern.permute.xlu0 1
    %661 = vperm.xlu0 %660, %v653
    %v662 = vpop.permute.xlu0 %661
    %v664 = vadd.f32 %v659, %v662
    %v665 = vmax.f32 %v664, 0.0
    %v667 = vsel %vm470, %v665, 0
    %669 = vmatprep.subr.mxu0 %v630
    %670 = vmatpush1.msra.mxu0 %v629
    %671 = vmatprep.subr.mxu0 %v634
    %672 = vmatpush1.msra.mxu0 %v633
    %673 = vmatprep.subr.mxu0 %v638
    %674 = vmatpush1.msra.mxu0 %v637
    %675 = vmatprep.subr.mxu0 %v642
    %676 = vmatpush1.msra.mxu0 %v641
    %677 = vmatprep.subr.mxu0 0.0
    %678 = vmatpush1.msra.mxu0 0.0
    %679 = vmatprep.subr.mxu0 0.0
    %680 = vmatpush1.msra.mxu0 0.0
    %681 = vmatprep.subr.mxu0 0.0
    %682 = vmatpush1.msra.mxu0 0.0
    %683 = vmatprep.subr.mxu0 0.0
    %684 = vmatpush1.msra.mxu0 0.0
    %685 = vmatprep.subr.mxu0 0.0
    %686 = vmatpush1.msra.mxu0 0.0
    %687 = vmatprep.subr.mxu0 0.0
    %688 = vmatpush1.msra.mxu0 0.0
    %689 = vmatprep.subr.mxu0 0.0
    %690 = vmatpush1.msra.mxu0 0.0
    %691 = vmatprep.subr.mxu0 0.0
    %692 = vmatpush1.msra.mxu0 0.0
    %693 = vmatprep.subr.mxu0 0.0
    %694 = vmatpush1.msra.mxu0 0.0
    %695 = vmatprep.subr.mxu0 0.0
    %696 = vmatpush1.msra.mxu0 0.0
    %697 = vmatprep.subr.mxu0 0.0
    %698 = vmatpush1.msra.mxu0 0.0
    %699 = vmatprep.subr.mxu0 0.0
    %700 = vmatpush1.msra.mxu0 0.0
    %701 = vmatprep.subr.mxu0 0.0
    %702 = vmatpush1.msra.mxu0 0.0
    %703 = vmatprep.subr.mxu0 0.0
    %704 = vmatpush1.msra.mxu0 0.0
    %705 = vmatprep.subr.mxu0 0.0
    %706 = vmatpush1.msra.mxu0 0.0
    %707 = vmatprep.subr.mxu0 0.0
    %708 = vmatpush1.msra.mxu0 0.0
    %709 = vmatprep.subr.mxu0 0.0
    %710 = vmatpush1.msra.mxu0 0.0
    %711 = vmatprep.subr.mxu0 0.0
    %712 = vmatpush1.msra.mxu0 0.0
    %713 = vmatprep.subr.mxu0 0.0
    %714 = vmatpush1.msra.mxu0 0.0
    %715 = vmatprep.subr.mxu0 0.0
    %716 = vmatpush1.msra.mxu0 0.0
    %717 = vmatprep.subr.mxu0 0.0
    %718 = vmatpush1.msra.mxu0 0.0
    %719 = vmatprep.subr.mxu0 0.0
    %720 = vmatpush1.msra.mxu0 0.0
    %721 = vmatprep.subr.mxu0 0.0
    %722 = vmatpush1.msra.mxu0 0.0
    %723 = vmatprep.subr.mxu0 0.0
    %724 = vmatpush1.msra.mxu0 0.0
    %725 = vmatprep.subr.mxu0 0.0
    %726 = vmatpush1.msra.mxu0 0.0
    %727 = vmatprep.subr.mxu0 0.0
    %728 = vmatpush1.msra.mxu0 0.0
    %729 = vmatprep.subr.mxu0 0.0
    %730 = vmatpush1.msra.mxu0 0.0
    %731 = vmatprep.subr.mxu0 0.0
    %732 = vmatpush1.msra.mxu0 0.0
    %733 = vmatprep.mubr.f32.mxu0 0.0
    %734 = vmatmul.mubr.f32.gmra.mrb[0].mxu0 %v667
    %v735 = vpop.f32.mrb[0].mxu0
    %v736 = vadd.f32 %v650, %v735
    %v737 = vpop.f32.mrb[0].mxu0
    %v738 = vadd.f32 %v651, %v737
    %739 = vdwg.mxu0
    %v740 = vmax.f32 %v736, %v738
    %741 = vmax.xlane.f32.xlu0 %v740
    %v742 = vpop.xlane.xlu0 %741
    %v743 = vsub.f32 %v736, %v742
    %v744 = vsub.f32 %v738, %v742
    %v745 = vmul.f32 %v743, 1.442695
    %v746 = vpow.pop %v745
    %v747 = vmul.f32 %v744, 1.442695
    %v748 = vpow.pop %v747
    %v749 = vadd.f32 %v746, %v748
    %750 = vadd.xlane.f32.xlu0 %v749
    %v751 = vpop.xlane.xlu0 %750
    %v752 = vrcp.pop %v751
    %v753 = vmul.f32 %v746, %v752
    %v754 = vmul.f32 %v748, %v752
    %755 = vmatprep.subr.mxu0 %v540
    %756 = vmatpush1.xpose.msra.mxu0 %v538
    %757 = vmatprep.subr.mxu0 %v544
    %758 = vmatpush1.xpose.msra.mxu0 %v542
    %759 = vmatprep.subr.mxu0 %v550
    %760 = vmatpush1.xpose.msra.mxu0 %v548
    %761 = vmatprep.subr.mxu0 %v554
    %762 = vmatpush1.xpose.msra.mxu0 %v552
    %763 = vmatprep.subr.mxu0 0.0
    %764 = vmatpush1.xpose.msra.mxu0 0.0
    %765 = vmatprep.subr.mxu0 0.0
    %766 = vmatpush1.xpose.msra.mxu0 0.0
    %767 = vmatprep.subr.mxu0 0.0
    %768 = vmatpush1.xpose.msra.mxu0 0.0
    %769 = vmatprep.subr.mxu0 0.0
    %770 = vmatpush1.xpose.msra.mxu0 0.0
    %771 = vmatprep.subr.mxu0 0.0
    %772 = vmatpush1.xpose.msra.mxu0 0.0
    %773 = vmatprep.subr.mxu0 0.0
    %774 = vmatpush1.xpose.msra.mxu0 0.0
    %775 = vmatprep.subr.mxu0 0.0
    %776 = vmatpush1.xpose.msra.mxu0 0.0
    %777 = vmatprep.subr.mxu0 0.0
    %778 = vmatpush1.xpose.msra.mxu0 0.0
    %779 = vmatprep.subr.mxu0 0.0
    %780 = vmatpush1.xpose.msra.mxu0 0.0
    %781 = vmatprep.subr.mxu0 0.0
    %782 = vmatpush1.xpose.msra.mxu0 0.0
    %783 = vmatprep.subr.mxu0 0.0
    %784 = vmatpush1.xpose.msra.mxu0 0.0
    %785 = vmatprep.subr.mxu0 0.0
    %786 = vmatpush1.xpose.msra.mxu0 0.0
    %787 = vmatprep.subr.mxu0 0.0
    %788 = vmatpush1.xpose.msra.mxu0 0.0
    %789 = vmatprep.subr.mxu0 0.0
    %790 = vmatpush1.xpose.msra.mxu0 0.0
    %791 = vmatprep.subr.mxu0 0.0
    %792 = vmatpush1.xpose.msra.mxu0 0.0
    %793 = vmatprep.subr.mxu0 0.0
    %794 = vmatpush1.xpose.msra.mxu0 0.0
    %795 = vmatprep.subr.mxu0 0.0
    %796 = vmatpush1.xpose.msra.mxu0 0.0
    %797 = vmatprep.subr.mxu0 0.0
    %798 = vmatpush1.xpose.msra.mxu0 0.0
    %799 = vmatprep.subr.mxu0 0.0
    %800 = vmatpush1.xpose.msra.mxu0 0.0
    %801 = vmatprep.subr.mxu0 0.0
    %802 = vmatpush1.xpose.msra.mxu0 0.0
    %803 = vmatprep.subr.mxu0 0.0
    %804 = vmatpush1.xpose.msra.mxu0 0.0
    %805 = vmatprep.subr.mxu0 0.0
    %806 = vmatpush1.xpose.msra.mxu0 0.0
    %807 = vmatprep.subr.mxu0 0.0
    %808 = vmatpush1.xpose.msra.mxu0 0.0
    %809 = vmatprep.subr.mxu0 0.0
    %810 = vmatpush1.xpose.msra.mxu0 0.0
    %811 = vmatprep.subr.mxu0 0.0
    %812 = vmatpush1.xpose.msra.mxu0 0.0
    %813 = vmatprep.subr.mxu0 0.0
    %814 = vmatpush1.xpose.msra.mxu0 0.0
    %815 = vmatprep.subr.mxu0 0.0
    %816 = vmatpush1.xpose.msra.mxu0 0.0
    %817 = vmatprep.subr.mxu0 0.0
    %818 = vmatpush1.xpose.msra.mxu0 0.0
    %819 = vmatprep.mubr.f32.mxu0 %v754
    %820 = vmatmul.mubr.f32.gmra.mrb[0].mxu0 %v753
    %v821 = vpop.f32.mrb[0].mxu0
    %v822 = vadd.f32 0.0, %v821
    %v823 = vpop.f32.mrb[0].mxu0
    %824 = vdwg.mxu0
    %825 = vset.pattern.permute.xlu0 2
    %826 = vperm.xlu0 %825, %v653
    %v827 = vpop.permute.xlu0 %826
    %v829 = vmul.f32 %v822, %v827
    %830 = vset.pattern.permute.xlu0 3
    %831 = vperm.xlu0 %830, %v653
    %v832 = vpop.permute.xlu0 %831
    %v834 = vadd.f32 %v829, %v832
    %835 = vst.msk [vmem:[#allocation5] sm:$0xff] %vm470, %v834
    %s836 = scalar_lea.vmem %s0, 8
    %v837 = vld [vmem:[%s836] sm:$0xff]
    %v838 = vld [vmem:[%s5] sm:$0xff]
    %840 = vset.pattern.permute.xlu0 0
    %841 = vperm.xlu0 %840, %v838
    %v842 = vpop.permute.xlu0 %841
    %v844 = vmul.f32 %v837, %v842
    %845 = vset.pattern.permute.xlu0 1
    %846 = vperm.xlu0 %845, %v838
    %v847 = vpop.permute.xlu0 %846
    %v849 = vadd.f32 %v844, %v847
    %v850 = vmax.f32 %v849, 0.0
    %v852 = vsel %vm470, %v850, 0
    %854 = vmatprep.subr.mxu0 %v632
    %855 = vmatpush1.msra.mxu0 %v631
    %856 = vmatprep.subr.mxu0 %v636
    %857 = vmatpush1.msra.mxu0 %v635
    %858 = vmatprep.subr.mxu0 %v640
    %859 = vmatpush1.msra.mxu0 %v639
    %860 = vmatprep.subr.mxu0 %v644
    %861 = vmatpush1.msra.mxu0 %v643
    %862 = vmatprep.subr.mxu0 0.0
    %863 = vmatpush1.msra.mxu0 0.0
    %864 = vmatprep.subr.mxu0 0.0
    %865 = vmatpush1.msra.mxu0 0.0
    %866 = vmatprep.subr.mxu0 0.0
    %867 = vmatpush1.msra.mxu0 0.0
    %868 = vmatprep.subr.mxu0 0.0
    %869 = vmatpush1.msra.mxu0 0.0
    %870 = vmatprep.subr.mxu0 0.0
    %871 = vmatpush1.msra.mxu0 0.0
    %872 = vmatprep.subr.mxu0 0.0
    %873 = vmatpush1.msra.mxu0 0.0
    %874 = vmatprep.subr.mxu0 0.0
    %875 = vmatpush1.msra.mxu0 0.0
    %876 = vmatprep.subr.mxu0 0.0
    %877 = vmatpush1.msra.mxu0 0.0
    %878 = vmatprep.subr.mxu0 0.0
    %879 = vmatpush1.msra.mxu0 0.0
    %880 = vmatprep.subr.mxu0 0.0
    %881 = vmatpush1.msra.mxu0 0.0
    %882 = vmatprep.subr.mxu0 0.0
    %883 = vmatpush1.msra.mxu0 0.0
    %884 = vmatprep.subr.mxu0 0.0
    %885 = vmatpush1.msra.mxu0 0.0
    %886 = vmatprep.subr.mxu0 0.0
    %887 = vmatpush1.msra.mxu0 0.0
    %888 = vmatprep.subr.mxu0 0.0
    %889 = vmatpush1.msra.mxu0 0.0
    %890 = vmatprep.subr.mxu0 0.0
    %891 = vmatpush1.msra.mxu0 0.0
    %892 = vmatprep.subr.mxu0 0.0
    %893 = vmatpush1.msra.mxu0 0.0
    %894 = vmatprep.subr.mxu0 0.0
    %895 = vmatpush1.msra.mxu0 0.0
    %896 = vmatprep.subr.mxu0 0.0
    %897 = vmatpush1.msra.mxu0 0.0
    %898 = vmatprep.subr.mxu0 0.0
    %899 = vmatpush1.msra.mxu0 0.0
    %900 = vmatprep.subr.mxu0 0.0
    %901 = vmatpush1.msra.mxu0 0.0
    %902 = vmatprep.subr.mxu0 0.0
    %903 = vmatpush1.msra.mxu0 0.0
    %904 = vmatprep.subr.mxu0 0.0
    %905 = vmatpush1.msra.mxu0 0.0
    %906 = vmatprep.subr.mxu0 0.0
    %907 = vmatpush1.msra.mxu0 0.0
    %908 = vmatprep.subr.mxu0 0.0
    %909 = vmatpush1.msra.mxu0 0.0
    %910 = vmatprep.subr.mxu0 0.0
    %911 = vmatpush1.msra.mxu0 0.0
    %912 = vmatprep.subr.mxu0 0.0
    %913 = vmatpush1.msra.mxu0 0.0
    %914 = vmatprep.subr.mxu0 0.0
    %915 = vmatpush1.msra.mxu0 0.0
    %916 = vmatprep.subr.mxu0 0.0
    %917 = vmatpush1.msra.mxu0 0.0
    %918 = vmatprep.mubr.f32.mxu0 0.0
    %919 = vmatmul.mubr.f32.gmra.mrb[0].mxu0 %v852
    %v920 = vpop.f32.mrb[0].mxu0
    %v921 = vadd.f32 %v650, %v920
    %v922 = vpop.f32.mrb[0].mxu0
    %v923 = vadd.f32 %v651, %v922
    %924 = vdwg.mxu0
    %v925 = vmax.f32 %v921, %v923
    %926 = vmax.xlane.f32.xlu0 %v925
    %v927 = vpop.xlane.xlu0 %926
    %v928 = vsub.f32 %v921, %v927
    %v929 = vsub.f32 %v923, %v927
    %v930 = vmul.f32 %v928, 1.442695
    %v931 = vpow.pop %v930
    %v932 = vmul.f32 %v929, 1.442695
    %v933 = vpow.pop %v932
    %v934 = vadd.f32 %v931, %v933
    %935 = vadd.xlane.f32.xlu0 %v934
    %v936 = vpop.xlane.xlu0 %935
    %v937 = vrcp.pop %v936
    %v938 = vmul.f32 %v931, %v937
    %v939 = vmul.f32 %v933, %v937
    %940 = vmatprep.subr.mxu0 %v613
    %941 = vmatpush1.xpose.msra.mxu0 %v611
    %942 = vmatprep.subr.mxu0 %v617
    %943 = vmatpush1.xpose.msra.mxu0 %v615
    %944 = vmatprep.subr.mxu0 %v623
    %945 = vmatpush1.xpose.msra.mxu0 %v621
    %946 = vmatprep.subr.mxu0 %v627
    %947 = vmatpush1.xpose.msra.mxu0 %v625
    %948 = vmatprep.subr.mxu0 0.0
    %949 = vmatpush1.xpose.msra.mxu0 0.0
    %950 = vmatprep.subr.mxu0 0.0
    %951 = vmatpush1.xpose.msra.mxu0 0.0
    %952 = vmatprep.subr.mxu0 0.0
    %953 = vmatpush1.xpose.msra.mxu0 0.0
    %954 = vmatprep.subr.mxu0 0.0
    %955 = vmatpush1.xpose.msra.mxu0 0.0
    %956 = vmatprep.subr.mxu0 0.0
    %957 = vmatpush1.xpose.msra.mxu0 0.0
    %958 = vmatprep.subr.mxu0 0.0
    %959 = vmatpush1.xpose.msra.mxu0 0.0
    %960 = vmatprep.subr.mxu0 0.0
    %961 = vmatpush1.xpose.msra.mxu0 0.0
    %962 = vmatprep.subr.mxu0 0.0
    %963 = vmatpush1.xpose.msra.mxu0 0.0
    %964 = vmatprep.subr.mxu0 0.0
    %965 = vmatpush1.xpose.msra.mxu0 0.0
    %966 = vmatprep.subr.mxu0 0.0
    %967 = vmatpush1.xpose.msra.mxu0 0.0
    %968 = vmatprep.subr.mxu0 0.0
    %969 = vmatpush1.xpose.msra.mxu0 0.0
    %970 = vmatprep.subr.mxu0 0.0
    %971 = vmatpush1.xpose.msra.mxu0 0.0
    %972 = vmatprep.subr.mxu0 0.0
    %973 = vmatpush1.xpose.msra.mxu0 0.0
    %974 = vmatprep.subr.mxu0 0.0
    %975 = vmatpush1.xpose.msra.mxu0 0.0
    %976 = vmatprep.subr.mxu0 0.0
    %977 = vmatpush1.xpose.msra.mxu0 0.0
    %978 = vmatprep.subr.mxu0 0.0
    %979 = vmatpush1.xpose.msra.mxu0 0.0
    %980 = vmatprep.subr.mxu0 0.0
    %981 = vmatpush1.xpose.msra.mxu0 0.0
    %982 = vmatprep.subr.mxu0 0.0
    %983 = vmatpush1.xpose.msra.mxu0 0.0
    %984 = vmatprep.subr.mxu0 0.0
    %985 = vmatpush1.xpose.msra.mxu0 0.0
    %986 = vmatprep.subr.mxu0 0.0
    %987 = vmatpush1.xpose.msra.mxu0 0.0
    %988 = vmatprep.subr.mxu0 0.0
    %989 = vmatpush1.xpose.msra.mxu0 0.0
    %990 = vmatprep.subr.mxu0 0.0
    %991 = vmatpush1.xpose.msra.mxu0 0.0
    %992 = vmatprep.subr.mxu0 0.0
    %993 = vmatpush1.xpose.msra.mxu0 0.0
    %994 = vmatprep.subr.mxu0 0.0
    %995 = vmatpush1.xpose.msra.mxu0 0.0
    %996 = vmatprep.subr.mxu0 0.0
    %997 = vmatpush1.xpose.msra.mxu0 0.0
    %998 = vmatprep.subr.mxu0 0.0
    %999 = vmatpush1.xpose.msra.mxu0 0.0
    %1000 = vmatprep.subr.mxu0 0.0
    %1001 = vmatpush1.xpose.msra.mxu0 0.0
    %1002 = vmatprep.subr.mxu0 0.0
    %1003 = vmatpush1.xpose.msra.mxu0 0.0
    %1004 = vmatprep.mubr.f32.mxu0 %v939
    %1005 = vmatmul.mubr.f32.gmra.mrb[0].mxu0 %v938
    %v1006 = vpop.f32.mrb[0].mxu0
    %v1007 = vadd.f32 0.0, %v1006
    %v1008 = vpop.f32.mrb[0].mxu0
    %1009 = vdwg.mxu0
    %1010 = vset.pattern.permute.xlu0 2
    %1011 = vperm.xlu0 %1010, %v838
    %v1012 = vpop.permute.xlu0 %1011
    %v1014 = vmul.f32 %v1007, %v1012
    %1015 = vset.pattern.permute.xlu0 3
    %1016 = vperm.xlu0 %1015, %v838
    %v1017 = vpop.permute.xlu0 %1016
    %v1019 = vadd.f32 %v1014, %v1017
    %s1020 = scalar_lea.vmem [#allocation5], 8
    %1021 = vst.msk [vmem:[%s1020] sm:$0xff] %vm470, %v1019
    // Predicated region
    $region30: #{tpu_custom_call.1} parent=1 // pred_check
      _
    $region31: #{tpu_custom_call.1} parent=1 // pred_check_branch
      %1023 = sbr.rel (0) target = $region33
    $region32: #{tpu_custom_call.1} parent=1 // pred_region
      %s1025 = ssub.s32 256, 256
      %1026 = vsyncadd [#allocation4], %s1025
      %s1027 = sshll.u32 [#allocation5], 4
      %s1028 = int_to_ptr.vmem [resolvable:$true] %s1027
      %1033 = dma.vmem_to_hbm [thread:$0]  %s1028, 256, %s6, [#allocation4], 128, 128, 8
    $region33: #{tpu_custom_call.1} parent=1 // pred_fallthru
      _
    // Predicated region
    $region34: #{tpu_custom_call.1} parent=1 // pred_check
      _
    $region35: #{tpu_custom_call.1} parent=1 // pred_check_branch
      %1035 = sbr.rel (0) target = $region37
    $region36: #{tpu_custom_call.1} parent=1 // pred_region
      %1036 = dma.done [#allocation4], 256
    $region37: #{tpu_custom_call.1} parent=1 // pred_fallthru
      _
    %1037 = vsyncpa [#allocation3], 1
    %1038 = vsyncpa [#allocation4], 1

</llo_original>
